<compile_context>
chip_gen: v5e
topology: v5e:2x2
jax: 0.10.0
libtpu: 0.0.40
codegen_flags: <defaults>
</compile_context>

<pallas_src>
import numpy as np
import jax
import jax.numpy as jnp
from jax.experimental import pallas as pl
from jax.experimental.pallas import tpu as pltpu


def _normalize_kernel_size(kernel_size):
    if isinstance(kernel_size, (tuple, list)):
        return int(kernel_size[0]), int(kernel_size[1])
    return int(kernel_size), int(kernel_size)


def _round_up(x, a):
    return -(-x // a) * a


def _pad128(x):
    return _round_up(x, 128)


def _vmem_capacity_bytes():
    """Per-TensorCore VMEM capacity; conservative fallback if the query fails."""
    try:
        info = pltpu.get_tpu_info()
        cap = getattr(info, "vmem_capacity_bytes", None)
        if cap:
            return int(cap)
    except Exception:
        pass
    return 64 * 1024 * 1024  # v7x per-TC (the smallest current generation)


def _choose_packing(total_stripes, stripe_lanes):
    """Pick m | total_stripes so the packed lane width m*stripe_lanes reaches >=128
    with minimal 128-lane padding.  The block-diagonal matmul's flops grow with m,
    so the search is capped at 2*ceil(128/stripe_lanes) (keeps it far from any
    compute roofline, even f32 on v5e)."""
    if total_stripes <= 0:
        return 1
    m0 = -(-128 // stripe_lanes)
    if m0 <= 1:
        return 1
    best_key, best_m = None, 1
    for m in range(1, min(total_stripes, 2 * m0) + 1):
        if total_stripes % m:
            continue
        lanes = m * stripe_lanes
        key = (lanes < 128, _pad128(lanes) / lanes, m)  # full lanes, low pad, small m
        if best_key is None or key < best_key:
            best_key, best_m = key, m
    return best_m


def _pool_matrix(m, kh, w, kw, ow, dtype):
    """(m*kh*w, m*ow) block-diagonal averaging matrix.

    Each diagonal block maps one packed stripe (kh rows x w cols, row-major) to its
    ow pooled outputs.  The 1/(kh*kw) scale is folded in, and W-tail columns
    (wcol >= ow*kw) are zero so no host-side W crop is needed."""
    scale = 1.0 / (kh * kw)
    b1 = np.zeros((kh * w, ow), dtype=np.float32)
    for i in range(kh):
        for o in range(ow):
            b1[i * w + o * kw: i * w + o * kw + kw, o] = scale
    if m == 1:
        b = b1
    else:
        b = np.zeros((m * kh * w, m * ow), dtype=np.float32)
        for s in range(m):
            b[s * kh * w:(s + 1) * kh * w, s * ow:(s + 1) * ow] = b1
    # Feed the MXU native low-precision operands only when the scale is exactly
    # representable in that dtype (e.g. bf16 with kh*kw a power of two).
    if np.dtype(dtype) != np.float32:
        cast = b.astype(dtype)
        if np.array_equal(cast.astype(np.float32), b):
            return cast
    return b


def _make_pool_kernel(n_arrays):
    """Refs: (bmat, x_0..x_{n-1}, o_0..o_{n-1}).
    One lane-dense MXU matmul per array performs the full H+W pool."""
    def kernel(bmat_ref, *refs):
        bmat = bmat_ref[...]
        x_refs = refs[:n_arrays]
        o_refs = refs[n_arrays:]
        for x_ref, o_ref in zip(x_refs, o_refs):
            o_ref[...] = jnp.dot(
                x_ref[...], bmat, preferred_element_type=jnp.float32
            ).astype(o_ref.dtype)
    return kernel


def _choose_block_rows(rows_total, lw_in, lw_out, itemsize, n_arrays, block_budget):
    """Rows per grid step: padding-aware (lanes rounded up to 128, rows rounded to
    the dtype sublane granularity), per-input DMA blocks capped at ~8 MiB, at least
    two near-equal grid steps so 'parallel' can balance across v7x's two TCs."""
    sub = max(8, 32 // max(itemsize, 1))              # f32:8, bf16:16, int8:32
    if rows_total <= sub:
        return rows_total                             # single full-extent block
    per_row = n_arrays * (2 * _pad128(lw_in) * itemsize       # double-buffered input
                          + 2 * _pad128(lw_out) * itemsize    # double-buffered output
                          + _pad128(lw_out) * 4)              # f32 matmul result
    rows = max(sub, block_budget // max(per_row, 1))
    rows = min(rows, max(sub, (8 << 20) // max(_pad128(lw_in) * itemsize, 1)))
    rows = min(rows, _round_up(-(-rows_total // 2), sub))     # keep >= 2 grid steps
    rows = max(sub, (rows // sub) * sub)
    if rows >= rows_total:
        return rows_total
    steps = -(-rows_total // rows)
    return max(sub, _round_up(-(-rows_total // steps), sub))  # equalize block sizes


def _avg_pool2d_pallas(xs, kernel_size):
    """avg_pool2d (stride = kernel_size, no padding, floor mode) applied to every
    array in `xs` (same-shaped NCHW tuple) with one fused pallas_call."""
    kh, kw = _normalize_kernel_size(kernel_size)
    n, c, h, w = xs[0].shape
    oh, ow = h // kh, w // kw
    if oh < 1 or ow < 1:
        raise ValueError("kernel_size larger than the input feature map")
    nb = n * c

    if h % kh != 0:
        # TODO(synk): fold the H-tail crop into BlockSpec indexing (per-image grid
        # axis) instead of materializing this cropped copy.
        xs = tuple(x[:, :, :oh * kh, :] for x in xs)
    # The W tail needs no crop: the averaging matrix zeroes the tail columns.

    stripe_lanes = kh * w                       # one full pooling stripe per row
    total_stripes = nb * oh
    m = _choose_packing(total_stripes, stripe_lanes)
    rows_total = total_stripes // m
    lw_in = m * stripe_lanes
    lw_out = m * ow

    # Free row-major reshapes: (N,C,OH*kh,W) -> (NB*OH, kh*W) -> (rows, m*kh*W).
    flats = [x.reshape(rows_total, lw_in) for x in xs]

    dtype = xs[0].dtype
    itemsize = jnp.dtype(dtype).itemsize
    bmat = jnp.asarray(_pool_matrix(m, kh, w, kw, ow, np.dtype(dtype)))

    vmem_cap = _vmem_capacity_bytes()
    block_budget = min(40 << 20, int(vmem_cap * 0.55))
    n_arrays = len(xs)
    rows_blk = _choose_block_rows(rows_total, lw_in, lw_out, itemsize,
                                  n_arrays, block_budget)
    grid = (pl.cdiv(rows_total, rows_blk),)

    per_row = n_arrays * (2 * _pad128(lw_in) * itemsize
                          + 2 * _pad128(lw_out) * itemsize + _pad128(lw_out) * 4)
    bmat_bytes = 2 * _round_up(bmat.shape[0], 8) * _pad128(bmat.shape[1]) * bmat.dtype.itemsize
    vmem_limit = int(min(vmem_cap,
                         max(32 << 20, rows_blk * per_row + bmat_bytes + (8 << 20))))

    in_bytes = sum(int(np.prod(f.shape)) * itemsize for f in flats)
    out_bytes = n_arrays * rows_total * lw_out * itemsize
    cost = pl.CostEstimate(
        flops=2 * n_arrays * rows_total * lw_in * lw_out,
        transcendentals=0,
        bytes_accessed=in_bytes + out_bytes + int(bmat.size) * bmat.dtype.itemsize,
    )

    kernel = _make_pool_kernel(n_arrays)
    in_specs = [pl.BlockSpec((lw_in, lw_out), lambda i: (0, 0))]             # bmat
    in_specs += [pl.BlockSpec((rows_blk, lw_in), lambda i: (i, 0)) for _ in xs]
    out_specs = tuple(pl.BlockSpec((rows_blk, lw_out), lambda i: (i, 0)) for _ in xs)
    out_shape = tuple(jax.ShapeDtypeStruct((rows_total, lw_out), x.dtype) for x in xs)

    outs = pl.pallas_call(
        kernel,
        out_shape=out_shape,
        grid_spec=pl.GridSpec(grid=grid, in_specs=in_specs, out_specs=out_specs),
        compiler_params=pltpu.CompilerParams(
            dimension_semantics=("parallel",),
            vmem_limit_bytes=vmem_limit,
        ),
        cost_estimate=cost,
    )(bmat, *flats)
    if not isinstance(outs, (tuple, list)):
        outs = (outs,)
    return tuple(o.reshape(n, c, oh, ow) for o in outs)


def bayes_avg_pool2d(inputs, kernel_size=2, mode='analytic'):
    """Forward pass of BayesAvgPool2d.

    'analytic': inputs = (mean, var), each (N, C, H, W); returns (pooled_mean,
                pooled_var) computed in a single fused pallas_call.
    'sampling' / 'MAP': inputs is a single (N, C, H, W) tensor; returns its pool.
    """
    if mode == 'analytic':
        inputs_mean, inputs_var = inputs
        out_mean, out_var = _avg_pool2d_pallas((inputs_mean, inputs_var), kernel_size)
        return (out_mean, out_var)
    else:
        (out,) = _avg_pool2d_pallas((inputs,), kernel_size)
        return out


def _avg_pool2d_ref(x: jax.Array, k: int) -> jax.Array:
    """Pure-JAX reference: avg_pool2d with square kernel/stride, no padding."""
    n, c, h, w = x.shape
    oh, ow = h // k, w // k
    xr = x[:, :, :oh * k, :ow * k].reshape(n, c, oh, k, ow, k)
    return xr.mean(axis=(3, 5))


if __name__ == "__main__":
    key = jax.random.PRNGKey(0)
    k_mean, k_var, k_samp, k_rag = jax.random.split(key, 4)

    N, C, H, W = 2, 4, 16, 16
    kernel_size = 2

    inputs_mean = jax.random.normal(k_mean, (N, C, H, W), dtype=jnp.float32)
    inputs_var = jnp.abs(jax.random.normal(k_var, (N, C, H, W), dtype=jnp.float32)) + 0.1
    samples = jax.random.normal(k_samp, (N, C, H, W), dtype=jnp.float32)

    # analytic mode (mean + variance pooled in one fused pallas_call)
    out_mean, out_var = bayes_avg_pool2d((inputs_mean, inputs_var),
                                         kernel_size=kernel_size, mode='analytic')
    out_mean = jax.block_until_ready(out_mean)
    out_var = jax.block_until_ready(out_var)

    # sampling / MAP mode
    out_samp = jax.block_until_ready(
        bayes_avg_pool2d(samples, kernel_size=kernel_size, mode='sampling'))

    ref_mean = _avg_pool2d_ref(inputs_mean, kernel_size)
    ref_var = _avg_pool2d_ref(inputs_var, kernel_size)
    ref_samp = _avg_pool2d_ref(samples, kernel_size)

    assert out_mean.shape == (N, C, H // kernel_size, W // kernel_size)
    np.testing.assert_allclose(np.asarray(out_mean), np.asarray(ref_mean), rtol=1e-5, atol=1e-5)
    np.testing.assert_allclose(np.asarray(out_var), np.asarray(ref_var), rtol=1e-5, atol=1e-5)
    np.testing.assert_allclose(np.asarray(out_samp), np.asarray(ref_samp), rtol=1e-5, atol=1e-5)

    # ragged spatial dims (floor mode): exercises the W-tail-in-matrix path and
    # the H-tail fallback crop.
    rag = jax.random.normal(k_rag, (2, 3, 15, 15), dtype=jnp.float32)
    out_rag = jax.block_until_ready(bayes_avg_pool2d(rag, kernel_size=2, mode='MAP'))
    ref_rag = _avg_pool2d_ref(rag, 2)
    assert out_rag.shape == (2, 3, 7, 7)
    np.testing.assert_allclose(np.asarray(out_rag), np.asarray(ref_rag), rtol=1e-5, atol=1e-5)

    print("KERNEL_OK")
</pallas_src>

<mosaic_0001>
module attributes {stable_mosaic.version = 11 : i64} {
  func.func @kernel(%arg0: i32, %arg1: memref<128x32xf32, #tpu.memory_space<vmem>>, %arg2: memref<8x128xf32, #tpu.memory_space<vmem>>, %arg3: memref<8x128xf32, #tpu.memory_space<vmem>>, %arg4: memref<8x32xf32, #tpu.memory_space<vmem>>, %arg5: memref<8x32xf32, #tpu.memory_space<vmem>>) attributes {dimension_semantics = [#tpu.dimension_semantics<parallel>], iteration_bounds = array<i64: 2>, scalar_prefetch = 0 : i64, scratch_operands = 0 : i64, tpu.core_type = #tpu.core_type<tc>, window_params = [{pipeline_mode = #tpu.pipeline_mode<synchronous>, transform_indices = @transform_0, window_bounds = array<i64: 128, 32>}, {transform_indices = @transform_1, window_bounds = array<i64: 8, 128>}, {transform_indices = @transform_2, window_bounds = array<i64: 8, 128>}, {transform_indices = @transform_3, window_bounds = array<i64: 8, 32>}, {transform_indices = @transform_4, window_bounds = array<i64: 8, 32>}]} {
    %c0 = arith.constant 0 : index
    %c0_0 = arith.constant 0 : index
    %0 = vector.load %arg1[%c0, %c0_0] : memref<128x32xf32, #tpu.memory_space<vmem>>, vector<128x32xf32>
    %c0_1 = arith.constant 0 : index
    %c0_2 = arith.constant 0 : index
    %1 = vector.load %arg2[%c0_1, %c0_2] : memref<8x128xf32, #tpu.memory_space<vmem>>, vector<8x128xf32>
    %cst = arith.constant dense<0.000000e+00> : vector<8x32xf32>
    %2 = tpu.matmul %1, %0, %cst {dimension_numbers = #tpu.dot_dimension_numbers<[1], [0], [0], [1], [0, 0, 1, 1], [], []>} : vector<8x128xf32>, vector<128x32xf32>, vector<8x32xf32> -> vector<8x32xf32>
    %c0_3 = arith.constant 0 : index
    %c0_4 = arith.constant 0 : index
    %3 = vector.load %arg4[%c0_3, %c0_4] : memref<8x32xf32, #tpu.memory_space<vmem>>, vector<8x32xf32>
    tpu.vector_store %arg4[%c0_3, %c0_4], %2 {strides = array<i32>} : memref<8x32xf32, #tpu.memory_space<vmem>>, vector<8x32xf32>,
    %c0_5 = arith.constant 0 : index
    %c0_6 = arith.constant 0 : index
    %4 = vector.load %arg3[%c0_5, %c0_6] : memref<8x128xf32, #tpu.memory_space<vmem>>, vector<8x128xf32>
    %cst_7 = arith.constant dense<0.000000e+00> : vector<8x32xf32>
    %5 = tpu.matmul %4, %0, %cst_7 {dimension_numbers = #tpu.dot_dimension_numbers<[1], [0], [0], [1], [0, 0, 1, 1], [], []>} : vector<8x128xf32>, vector<128x32xf32>, vector<8x32xf32> -> vector<8x32xf32>
    %c0_8 = arith.constant 0 : index
    %c0_9 = arith.constant 0 : index
    %6 = vector.load %arg5[%c0_8, %c0_9] : memref<8x32xf32, #tpu.memory_space<vmem>>, vector<8x32xf32>
    tpu.vector_store %arg5[%c0_8, %c0_9], %5 {strides = array<i32>} : memref<8x32xf32, #tpu.memory_space<vmem>>, vector<8x32xf32>,
    return
  }
  func.func @transform_0(%arg0: i32) -> (i32, i32) {
    %c0_i32 = arith.constant 0 : i32
    %c0_i32_0 = arith.constant 0 : i32
    %c0_i32_1 = arith.constant 0 : i32
    return %c0_i32, %c0_i32_0 : i32, i32
  }
  func.func @transform_1(%arg0: i32) -> (i32, i32) {
    %c0_i32 = arith.constant 0 : i32
    %c0_i32_0 = arith.constant 0 : i32
    return %arg0, %c0_i32 : i32, i32
  }
  func.func @transform_2(%arg0: i32) -> (i32, i32) {
    %c0_i32 = arith.constant 0 : i32
    %c0_i32_0 = arith.constant 0 : i32
    return %arg0, %c0_i32 : i32, i32
  }
  func.func @transform_3(%arg0: i32) -> (i32, i32) {
    %c0_i32 = arith.constant 0 : i32
    %c0_i32_0 = arith.constant 0 : i32
    return %arg0, %c0_i32 : i32, i32
  }
  func.func @transform_4(%arg0: i32) -> (i32, i32) {
    %c0_i32 = arith.constant 0 : i32
    %c0_i32_0 = arith.constant 0 : i32
    return %arg0, %c0_i32 : i32, i32
  }
}

</mosaic_0001>

<llo_original>
// kernel: tpu_custom_call.1
$region0: #{tpu_custom_call.1}
  #allocation0 [shape = 'u32[]', space=smem, size = 0x4, offset = 0x4, fixed_abs, tag = 'smem constant byte address 0x4 - core index']
  #allocation1 [shape = 'u32[72,128]{1,0:T(1,128)}', space=vmem, size = 0x9000, scoped, tag = 'internal scratch']
  %s0 = inlined_call_operand.vmem [shape: f32[128,32], index: 0, kind: input, shape index: {}]
  %s1 = inlined_call_operand.vmem [shape: f32[16,128], index: 1, kind: input, shape index: {}]
  %s2 = inlined_call_operand.vmem [shape: f32[16,128], index: 2, kind: input, shape index: {}]
  %s3 = inlined_call_operand.hbm [shape: f32[16,32], index: 3, kind: output, shape index: {0}]
  %s4 = inlined_call_operand.hbm [shape: f32[16,32], index: 4, kind: output, shape index: {1}]
  %5 = xla_tuple %s3, %s4
  %s6 = sld [smem:[#allocation0]]
  $region53: #{tpu_custom_call.1} parent=0
    _
  %s8 = ssub.s32 1, %s6
  %s9 = scalar_select 0, %s8, %s6
  $region1: #{tpu_custom_call.1} parent=0
    #allocation2 [shape = 'u8[8192]{0}', space=vmem, size = 0x2000, scoped, tag = 'output window, operand 0']
    #allocation3 [shape = 's32[2]{0}', space=sflag, size = 0x8, scoped, tag = 'scoped memory for tpu_custom_call.1']
    #allocation4 [shape = 'u8[8192]{0}', space=vmem, size = 0x2000, scoped, tag = 'output window, operand 1']
    #allocation5 [shape = 's32[2]{0}', space=sflag, size = 0x8, scoped, tag = 'scoped memory for tpu_custom_call.1']
    %10 = vsyncpa [#allocation3], 0
    %s11 = scalar_lea.sflag [#allocation3], 1
    %12 = vsyncpa %s11, 0
    %13 = vsyncpa [#allocation5], 0
    %s14 = scalar_lea.sflag [#allocation5], 1
    %15 = vsyncpa %s14, 0
    loop: start=0, step=1, limit=4
    $region2: #{tpu_custom_call.1} parent=1 // loop_pre_header
      _
    $region3: #{tpu_custom_call.1} parent=1 // loop_header
      %s17 = sphi 0, %s21
      %p18 = scmp.ge.s32.totalorder %s17, 4
      %s25 = sphi 0, %s25
      %s27 = sphi 0, %s25
      %s28 = sphi 0, %s27
      %s42 = sphi 0, %s28
      %s48 = sphi 0, %s50
      %s51 = sphi 0, %s48
      %s52 = sphi 0, %s51
      %s68 = sphi 0, %s52
      %s74 = sphi 0, %s76
      %s77 = sphi 0, %s74
      %s78 = sphi 0, %s77
      %s94 = sphi 0, %s78
      %s100 = sphi 0, %s102
      %s103 = sphi 0, %s100
      %s104 = sphi 0, %s103
      %s120 = sphi 0, %s104
      %s126 = sphi 0, %s128
      %s129 = sphi 0, %s126
      %s130 = sphi 0, %s129
      %s146 = sphi 0, %s130
    $region4: #{tpu_custom_call.1} parent=1 // loop_header_branch
      %20 = sbr.rel (%p18) target = $region8
    $region5: #{tpu_custom_call.1} parent=1 // loop_body
      %s22 = ssub.s32 %s17, 1
      %s23 = ssub.s32 %s17, 2
      %s24 = sadd.s32 %s17, 1
      %s26 = sadd.s32 %s25, 1
      %p29 = scmp.eq.s32.totalorder %s17, 1
      %p30 = scmp.ne.s32.totalorder %s25, %s27
      %p31 = scmp.eq.s32.totalorder %s17, 0
      %p32 = por %p30, %p31
      %p33 = scmp.ne.s32.totalorder %s25, %s27
      %p34 = scmp.eq.s32.totalorder %s22, 1
      %p35 = por %p33, %p34
      %p36 = scmp.ne.s32.totalorder %s27, %s28
      %p37 = scmp.eq.s32.totalorder %s22, 0
      %p38 = por %p36, %p37
      %p39 = scmp.ne.s32.totalorder %s27, %s28
      %p40 = scmp.eq.s32.totalorder %s23, 1
      %p41 = por %p39, %p40
      %p43 = scmp.ne.s32.totalorder %s28, %s42
      %p44 = scmp.eq.s32.totalorder %s23, 0
      %p45 = por %p43, %p44
      %s46 = ssub.s32 %s17, %s24
      %p47 = scmp.eq.s32.totalorder %s46, 0
      %s49 = sadd.s32 %s48, 1
      %s50 = scalar_select %p47, %s48, %s49
      %p53 = pneg %p47
      %p54 = scmp.eq.s32.totalorder %s17, 1
      %p55 = por %p53, %p54
      %p56 = scmp.ne.s32.totalorder %s48, %s51
      %p57 = scmp.eq.s32.totalorder %s17, 0
      %p58 = por %p56, %p57
      %p59 = scmp.ne.s32.totalorder %s48, %s51
      %p60 = scmp.eq.s32.totalorder %s22, 1
      %p61 = por %p59, %p60
      %p62 = scmp.ne.s32.totalorder %s51, %s52
      %p63 = scmp.eq.s32.totalorder %s22, 0
      %p64 = por %p62, %p63
      %p65 = scmp.ne.s32.totalorder %s51, %s52
      %p66 = scmp.eq.s32.totalorder %s23, 1
      %p67 = por %p65, %p66
      %p69 = scmp.ne.s32.totalorder %s52, %s68
      %p70 = scmp.eq.s32.totalorder %s23, 0
      %p71 = por %p69, %p70
      %s72 = ssub.s32 %s17, %s24
      %p73 = scmp.eq.s32.totalorder %s72, 0
      %s75 = sadd.s32 %s74, 1
      %s76 = scalar_select %p73, %s74, %s75
      %p79 = pneg %p73
      %p80 = scmp.eq.s32.totalorder %s17, 1
      %p81 = por %p79, %p80
      %p82 = scmp.ne.s32.totalorder %s74, %s77
      %p83 = scmp.eq.s32.totalorder %s17, 0
      %p84 = por %p82, %p83
      %p85 = scmp.ne.s32.totalorder %s74, %s77
      %p86 = scmp.eq.s32.totalorder %s22, 1
      %p87 = por %p85, %p86
      %p88 = scmp.ne.s32.totalorder %s77, %s78
      %p89 = scmp.eq.s32.totalorder %s22, 0
      %p90 = por %p88, %p89
      %p91 = scmp.ne.s32.totalorder %s77, %s78
      %p92 = scmp.eq.s32.totalorder %s23, 1
      %p93 = por %p91, %p92
      %p95 = scmp.ne.s32.totalorder %s78, %s94
      %p96 = scmp.eq.s32.totalorder %s23, 0
      %p97 = por %p95, %p96
      %s98 = ssub.s32 %s17, %s24
      %p99 = scmp.eq.s32.totalorder %s98, 0
      %s101 = sadd.s32 %s100, 1
      %s102 = scalar_select %p99, %s100, %s101
      %p105 = pneg %p99
      %p106 = scmp.eq.s32.totalorder %s17, 1
      %p107 = por %p105, %p106
      %p108 = scmp.ne.s32.totalorder %s100, %s103
      %p109 = scmp.eq.s32.totalorder %s17, 0
      %p110 = por %p108, %p109
      %p111 = scmp.ne.s32.totalorder %s100, %s103
      %p112 = scmp.eq.s32.totalorder %s22, 1
      %p113 = por %p111, %p112
      %p114 = scmp.ne.s32.totalorder %s103, %s104
      %p115 = scmp.eq.s32.totalorder %s22, 0
      %p116 = por %p114, %p115
      %p117 = scmp.ne.s32.totalorder %s103, %s104
      %p118 = scmp.eq.s32.totalorder %s23, 1
      %p119 = por %p117, %p118
      %p121 = scmp.ne.s32.totalorder %s104, %s120
      %p122 = scmp.eq.s32.totalorder %s23, 0
      %p123 = por %p121, %p122
      %s124 = ssub.s32 %s17, %s24
      %p125 = scmp.eq.s32.totalorder %s124, 0
      %s127 = sadd.s32 %s126, 1
      %s128 = scalar_select %p125, %s126, %s127
      %p131 = pneg %p125
      %p132 = scmp.eq.s32.totalorder %s17, 1
      %p133 = por %p131, %p132
      %p134 = scmp.ne.s32.totalorder %s126, %s129
      %p135 = scmp.eq.s32.totalorder %s17, 0
      %p136 = por %p134, %p135
      %p137 = scmp.ne.s32.totalorder %s126, %s129
      %p138 = scmp.eq.s32.totalorder %s22, 1
      %p139 = por %p137, %p138
      %p140 = scmp.ne.s32.totalorder %s129, %s130
      %p141 = scmp.eq.s32.totalorder %s22, 0
      %p142 = por %p140, %p141
      %p143 = scmp.ne.s32.totalorder %s129, %s130
      %p144 = scmp.eq.s32.totalorder %s23, 1
      %p145 = por %p143, %p144
      %p147 = scmp.ne.s32.totalorder %s130, %s146
      %p148 = scmp.eq.s32.totalorder %s23, 0
      %p149 = por %p147, %p148
      %p150 = scmp.le.s32.totalorder 1, %s17
      %p151 = scmp.lt.s32.totalorder %s17, 3
      %p152 = pnand %p150, %p151
      %p153 = pneg %p152
      // Predicated region
      $region9: #{tpu_custom_call.1} parent=5 // pred_check
        _
      $region10: #{tpu_custom_call.1} parent=5 // pred_check_branch
        %155 = sbr.rel (%p152) target = $region12
      $region11: #{tpu_custom_call.1} parent=5 // pred_region
        %s156 = ssub.s32 %s17, 1
        // Predicated region
        $region13: #{tpu_custom_call.1} parent=11 // pred_check
          %p157 = pneg %p38
        $region14: #{tpu_custom_call.1} parent=11 // pred_check_branch
          %159 = sbr.rel (%p157) target = $region16
        $region15: #{tpu_custom_call.1} parent=11 // pred_region
          _
        $region16: #{tpu_custom_call.1} parent=11 // pred_fallthru
          _
      $region12: #{tpu_custom_call.1} parent=5 // pred_fallthru
        _
      %p160 = scmp.lt.s32.totalorder %s17, 2
      // Predicated region
      $region17: #{tpu_custom_call.1} parent=5 // pred_check
        %p161 = pneg %p160
      $region18: #{tpu_custom_call.1} parent=5 // pred_check_branch
        %163 = sbr.rel (%p161) target = $region20
      $region19: #{tpu_custom_call.1} parent=5 // pred_region
        // Predicated region
        $region21: #{tpu_custom_call.1} parent=19 // pred_check
          %p164 = pneg %p58
        $region22: #{tpu_custom_call.1} parent=19 // pred_check_branch
          %166 = sbr.rel (%p164) target = $region24
        $region23: #{tpu_custom_call.1} parent=19 // pred_region
          %p167 = scmp.lt.s32.totalorder %s17, 1
          %s168 = scalar_select %p167, %s17, 1
          %s169 = smul.addr %s168, 8
          %s170 = scalar_lea.vmem %s1, %s169
        $region24: #{tpu_custom_call.1} parent=19 // pred_fallthru
          _
        // Predicated region
        $region25: #{tpu_custom_call.1} parent=19 // pred_check
          %p171 = pneg %p84
        $region26: #{tpu_custom_call.1} parent=19 // pred_check_branch
          %173 = sbr.rel (%p171) target = $region28
        $region27: #{tpu_custom_call.1} parent=19 // pred_region
          %p174 = scmp.lt.s32.totalorder %s17, 1
          %s175 = scalar_select %p174, %s17, 1
          %s176 = smul.addr %s175, 8
          %s177 = scalar_lea.vmem %s2, %s176
        $region28: #{tpu_custom_call.1} parent=19 // pred_fallthru
          _
      $region20: #{tpu_custom_call.1} parent=5 // pred_fallthru
        _
      %p178 = scmp.le.s32.totalorder 1, %s17
      %p179 = scmp.lt.s32.totalorder %s17, 3
      %p180 = pnand %p178, %p179
      %p181 = pneg %p180
      // Predicated region
      $region29: #{tpu_custom_call.1} parent=5 // pred_check
        _
      $region30: #{tpu_custom_call.1} parent=5 // pred_check_branch
        %183 = sbr.rel (%p180) target = $region32
      $region31: #{tpu_custom_call.1} parent=5 // pred_region
        %s184 = ssub.s32 %s17, 1
        %p185 = pneg %p38
        %p186 = pneg %p35
        %p187 = scmp.lt.s32.totalorder %s22, 1
        %s188 = scalar_select %p187, %s22, 1
        %s189 = smul.addr %s188, 8
        %s190 = scalar_lea.vmem %s1, %s189
        %p191 = pneg %p64
        %p192 = pneg %p61
        %p193 = scmp.lt.s32.totalorder %s22, 1
        %s194 = scalar_select %p193, %s22, 1
        %s195 = smul.addr %s194, 8
        %s196 = scalar_lea.vmem %s2, %s195
        %p197 = pneg %p90
        %p198 = pneg %p87
        %p199 = pneg %p116
        %p200 = pneg %p113
        %s201 = sand.u32 %s103, 1
        %s202 = scalar_lea.sflag [#allocation3], %s201
        %s203 = sand.u32 %s103, 1
        %s204 = smul.addr %s203, 8
        %s205 = scalar_lea.vmem [#allocation2], %s204
        %p206 = pneg %p142
        %p207 = pneg %p139
        %s208 = sand.u32 %s129, 1
        %s209 = scalar_lea.sflag [#allocation5], %s208
        %s210 = sand.u32 %s129, 1
        %s211 = smul.addr %s210, 8
        %s212 = scalar_lea.vmem [#allocation4], %s211
        %p213 = scmp.lt.s32.totalorder %s22, 1
        %s214 = scalar_select %p213, %s22, 1
        %s215 = smul.addr %s214, 8
        %s216 = scalar_lea.vmem %s1, %s215
        %p217 = scmp.lt.s32.totalorder %s22, 1
        %s218 = scalar_select %p217, %s22, 1
        %s219 = smul.addr %s218, 8
        %s220 = scalar_lea.vmem %s2, %s219
        %v221 = vld [vmem:[%s0] sm:$0xff]
        %v222 = vld [vmem:[%s0 + $0x8] sm:$0xff]
        %v223 = vld [vmem:[%s0 + $0x10] sm:$0xff]
        %v224 = vld [vmem:[%s0 + $0x18] sm:$0xff]
        %v225 = vld [vmem:[%s0 + $0x20] sm:$0xff]
        %v226 = vld [vmem:[%s0 + $0x28] sm:$0xff]
        %v227 = vld [vmem:[%s0 + $0x30] sm:$0xff]
        %v228 = vld [vmem:[%s0 + $0x38] sm:$0xff]
        %v229 = vld [vmem:[%s0 + $0x40] sm:$0xff]
        %v230 = vld [vmem:[%s0 + $0x48] sm:$0xff]
        %v231 = vld [vmem:[%s0 + $0x50] sm:$0xff]
        %v232 = vld [vmem:[%s0 + $0x58] sm:$0xff]
        %v233 = vld [vmem:[%s0 + $0x60] sm:$0xff]
        %v234 = vld [vmem:[%s0 + $0x68] sm:$0xff]
        %v235 = vld [vmem:[%s0 + $0x70] sm:$0xff]
        %v236 = vld [vmem:[%s0 + $0x78] sm:$0xff]
        %v237 = vld [vmem:[%s216] sm:$0xff]
        %238 = vmatpush.msra.mxu0 %v236
        %239 = vmatpush.msra.mxu0 %v235
        %240 = vmatpush.msra.mxu0 %v234
        %241 = vmatpush.msra.mxu0 %v233
        %242 = vmatpush.msra.mxu0 %v232
        %243 = vmatpush.msra.mxu0 %v231
        %244 = vmatpush.msra.mxu0 %v230
        %245 = vmatpush.msra.mxu0 %v229
        %246 = vmatpush.msra.mxu0 %v228
        %247 = vmatpush.msra.mxu0 %v227
        %248 = vmatpush.msra.mxu0 %v226
        %249 = vmatpush.msra.mxu0 %v225
        %250 = vmatpush.msra.mxu0 %v224
        %251 = vmatpush.msra.mxu0 %v223
        %252 = vmatpush.msra.mxu0 %v222
        %253 = vmatpush.msra.mxu0 %v221
        %254 = vmatmul.f32.gmra.mxu0 %v237
        %v255 = vpop.f32.mrf.mxu0
        %v256 = vadd.f32 0.0, %v255
        %257 = vdwg.mxu0
        %vm258 = vcmask 261120
        %259 = vst.msk [vmem:[%s205] sm:$0xff] %vm258, %v256
        %v260 = vld [vmem:[%s220] sm:$0xff]
        %261 = vmatpush.msra.mxu0 %v236
        %262 = vmatpush.msra.mxu0 %v235
        %263 = vmatpush.msra.mxu0 %v234
        %264 = vmatpush.msra.mxu0 %v233
        %265 = vmatpush.msra.mxu0 %v232
        %266 = vmatpush.msra.mxu0 %v231
        %267 = vmatpush.msra.mxu0 %v230
        %268 = vmatpush.msra.mxu0 %v229
        %269 = vmatpush.msra.mxu0 %v228
        %270 = vmatpush.msra.mxu0 %v227
        %271 = vmatpush.msra.mxu0 %v226
        %272 = vmatpush.msra.mxu0 %v225
        %273 = vmatpush.msra.mxu0 %v224
        %274 = vmatpush.msra.mxu0 %v223
        %275 = vmatpush.msra.mxu0 %v222
        %276 = vmatpush.msra.mxu0 %v221
        %277 = vmatmul.f32.gmra.mxu0 %v260
        %v278 = vpop.f32.mrf.mxu0
        %v279 = vadd.f32 0.0, %v278
        %280 = vdwg.mxu0
        %281 = vst.msk [vmem:[%s212] sm:$0xff] %vm258, %v279
        %s282 = sand.u32 %s103, 1
        %s283 = scalar_lea.sflag [#allocation3], %s282
        %s284 = sand.u32 %s103, 1
        %s285 = smul.addr %s284, 8
        %s286 = scalar_lea.vmem [#allocation2], %s285
        %s287 = sand.u32 %s129, 1
        %s288 = scalar_lea.sflag [#allocation5], %s287
        %s289 = sand.u32 %s129, 1
        %s290 = smul.addr %s289, 8
        %s291 = scalar_lea.vmem [#allocation4], %s290
        // Predicated region
        $region33: #{tpu_custom_call.1} parent=31 // pred_check
          %p292 = pneg %p113
        $region34: #{tpu_custom_call.1} parent=31 // pred_check_branch
          %294 = sbr.rel (%p292) target = $region36
        $region35: #{tpu_custom_call.1} parent=31 // pred_region
          %296 = vsyncadd %s283, 0
          %s297 = smul.addr %s22, 8
          %s298 = scalar_lea.hbm %s3, %s297
          %s300 = sshll.u32 %s286, 4
          %s301 = int_to_ptr.vmem [resolvable:$true] %s300
          %s302 = sshll.u32 %s298, 4
          %s303 = int_to_ptr.hbm [resolvable:$true] %s302
          %305 = dma.vmem_to_hbm [thread:$0]  %s301, 128, %s303, %s283
        $region36: #{tpu_custom_call.1} parent=31 // pred_fallthru
          _
        // Predicated region
        $region37: #{tpu_custom_call.1} parent=31 // pred_check
          %p306 = pneg %p139
        $region38: #{tpu_custom_call.1} parent=31 // pred_check_branch
          %308 = sbr.rel (%p306) target = $region40
        $region39: #{tpu_custom_call.1} parent=31 // pred_region
          %310 = vsyncadd %s288, 0
          %s311 = smul.addr %s22, 8
          %s312 = scalar_lea.hbm %s4, %s311
          %s314 = sshll.u32 %s291, 4
          %s315 = int_to_ptr.vmem [resolvable:$true] %s314
          %s316 = sshll.u32 %s312, 4
          %s317 = int_to_ptr.hbm [resolvable:$true] %s316
          %319 = dma.vmem_to_hbm [thread:$0]  %s315, 128, %s317, %s288
        $region40: #{tpu_custom_call.1} parent=31 // pred_fallthru
          _
      $region32: #{tpu_custom_call.1} parent=5 // pred_fallthru
        _
      %p320 = scmp.le.s32.totalorder 2, %s17
      // Predicated region
      $region41: #{tpu_custom_call.1} parent=5 // pred_check
        %p321 = pneg %p320
      $region42: #{tpu_custom_call.1} parent=5 // pred_check_branch
        %323 = sbr.rel (%p321) target = $region44
      $region43: #{tpu_custom_call.1} parent=5 // pred_region
        %s324 = ssub.s32 %s17, 2
        // Predicated region
        $region45: #{tpu_custom_call.1} parent=43 // pred_check
          %p325 = pneg %p119
        $region46: #{tpu_custom_call.1} parent=43 // pred_check_branch
          %327 = sbr.rel (%p325) target = $region48
        $region47: #{tpu_custom_call.1} parent=43 // pred_region
          %s328 = sand.u32 %s104, 1
          %s329 = scalar_lea.sflag [#allocation3], %s328
          %s330 = sand.u32 %s104, 1
          %s331 = smul.addr %s330, 8
          %s332 = scalar_lea.vmem [#allocation2], %s331
          %334 = dma.done %s329, 128
        $region48: #{tpu_custom_call.1} parent=43 // pred_fallthru
          _
        // Predicated region
        $region49: #{tpu_custom_call.1} parent=43 // pred_check
          %p335 = pneg %p145
        $region50: #{tpu_custom_call.1} parent=43 // pred_check_branch
          %337 = sbr.rel (%p335) target = $region52
        $region51: #{tpu_custom_call.1} parent=43 // pred_region
          %s338 = sand.u32 %s130, 1
          %s339 = scalar_lea.sflag [#allocation5], %s338
          %s340 = sand.u32 %s130, 1
          %s341 = smul.addr %s340, 8
          %s342 = scalar_lea.vmem [#allocation4], %s341
          %344 = dma.done %s339, 128
        $region52: #{tpu_custom_call.1} parent=43 // pred_fallthru
          _
      $region44: #{tpu_custom_call.1} parent=5 // pred_fallthru
        _
    $region6: #{tpu_custom_call.1} parent=1 // loop_footer
      %s21 = sadd.s32 1, %s17
    $region7: #{tpu_custom_call.1} parent=1 // loop_footer_branch
      %16 = sbr.rel target = $region3
    $region8: #{tpu_custom_call.1} parent=1 // loop_exit
      _
    %345 = vsyncpa [#allocation3], 1
    %s346 = scalar_lea.sflag [#allocation3], 1
    %347 = vsyncpa %s346, 1
    %348 = vsyncpa [#allocation5], 1
    %s349 = scalar_lea.sflag [#allocation5], 1
    %350 = vsyncpa %s349, 1

</llo_original>
